<compile_context>
chip_gen: v6e
topology: v6e:2x2x1
jax: 0.10.0
libtpu: 0.0.40
codegen_flags: <defaults>
</compile_context>

<pallas_src>
import functools
import jax
import jax.numpy as jnp
from jax.experimental import pallas as pl
from jax.experimental.pallas import tpu as pltpu


def _dense_kernel(n_branches, *refs):
    """refs = [x0, w0, x1, w1, ..., bias, out]; w_i already (K_i, tn)."""
    o_ref = refs[-1]
    b_ref = refs[-2]                      # (1, tn) f32, pre-summed over branches
    acc = b_ref[...]                      # broadcasts to (tm, tn) on first add
    for i in range(n_branches):
        x_ref, w_ref = refs[2 * i], refs[2 * i + 1]
        acc = acc + jnp.dot(x_ref[...], w_ref[...],
                            preferred_element_type=jnp.float32)
    o_ref[...] = acc.astype(o_ref.dtype)


def _round_up(x, m):
    return ((x + m - 1) // m) * m


def dense_forward(xs, params, *, tm=256, tn=512, compute_dtype=None):
    """Pallas equivalent of Dense(*Ws)(*xs).

    xs:     list of arrays, each (B, in_i)
    params: list aligned with the Ws slots; each entry is (W, b) with
            W (out, in_i), b (out,), or None (skipped, like the module).
    compute_dtype: dtype fed to the MXU (e.g. jnp.bfloat16 on v6e/v7x);
            accumulation is always f32.  Default: input dtype.
    """
    xs = xs[-len(params):]
    active = [(x, W, b) for x, p in zip(xs, params) if p is not None
              for (W, b) in [p]]
    assert active, "Dense with all-None Ws is undefined"

    B = active[0][0].shape[0]
    out_features = active[0][1].shape[0]
    out_dtype = active[0][0].dtype
    n = len(active)
    if compute_dtype is None:
        compute_dtype = out_dtype

    # ---- Tile selection: multiples of (8, 128), clamped to the padded
    #      problem so small shapes still work (single tile). ----
    B_pad = _round_up(B, 8)
    tm = _round_up(min(tm, B_pad), 8)
    B_pad = _round_up(B_pad, tm)

    OUT_pad = _round_up(out_features, 128)
    tn = _round_up(min(tn, OUT_pad), 128)
    OUT_pad = _round_up(OUT_pad, tn)

    # ---- Per-branch preprocessing: pad K to x128, pre-transpose W to (K, OUT),
    #      fold all biases into a single vector. ----
    flat_inputs = []
    in_specs = []
    bias_total = jnp.zeros((out_features,), jnp.float32)
    k_pads = []
    for x, W, b in active:
        k = x.shape[1]
        assert W.shape == (out_features, k)
        K_pad = _round_up(k, 128)
        k_pads.append(K_pad)

        x_p = jnp.zeros((B_pad, K_pad), compute_dtype)
        x_p = x_p.at[:B, :k].set(x.astype(compute_dtype))

        w_t = jnp.zeros((K_pad, OUT_pad), compute_dtype)
        w_t = w_t.at[:k, :out_features].set(W.T.astype(compute_dtype))

        bias_total = bias_total + b.astype(jnp.float32)

        flat_inputs += [x_p, w_t]
        in_specs += [
            # activations: new block each inner (batch) step
            pl.BlockSpec((tm, K_pad), lambda j, i: (i, 0)),
            # weights: block index constant over the inner batch sweep -> reused
            pl.BlockSpec((K_pad, tn), lambda j, i: (0, j)),
        ]

    bias_p = jnp.zeros((1, OUT_pad), jnp.float32)
    bias_p = bias_p.at[0, :out_features].set(bias_total)
    flat_inputs.append(bias_p)
    in_specs.append(pl.BlockSpec((1, tn), lambda j, i: (0, j)))

    # batch innermost -> weight/bias tiles are not re-DMA'd per batch tile
    grid = (OUT_pad // tn, B_pad // tm)

    # ---- Explicit VMEM budget (double-buffered inputs + output). ----
    itemsize = jnp.dtype(compute_dtype).itemsize
    vmem_est = sum(2 * (tm * kp + kp * tn) * itemsize for kp in k_pads)
    vmem_est += 2 * tn * 4                                   # bias
    vmem_est += 2 * tm * tn * jnp.dtype(out_dtype).itemsize  # output
    vmem_limit = int(min(max(vmem_est + (4 << 20), 32 << 20), 48 << 20))

    out_padded = pl.pallas_call(
        functools.partial(_dense_kernel, n),
        out_shape=jax.ShapeDtypeStruct((B_pad, OUT_pad), out_dtype),
        grid_spec=pltpu.PrefetchScalarGridSpec(
            num_scalar_prefetch=0,
            grid=grid,
            in_specs=in_specs,
            out_specs=pl.BlockSpec((tm, tn), lambda j, i: (i, j)),
        ),
        compiler_params=pltpu.CompilerParams(
            dimension_semantics=("parallel", "parallel"),
            vmem_limit_bytes=vmem_limit),
    )(*flat_inputs)

    return out_padded[:B, :out_features]


def _init_linear(key, out_f, in_f, dtype=jnp.float32):
    """Deterministic stand-in for nn.Linear's default init (uniform +/- 1/sqrt(in))."""
    kw, kb = jax.random.split(key)
    bound = 1.0 / (in_f ** 0.5)
    W = jax.random.uniform(kw, (out_f, in_f), dtype, minval=-bound, maxval=bound)
    b = jax.random.uniform(kb, (out_f,), dtype, minval=-bound, maxval=bound)
    return W, b


if __name__ == "__main__":
    key = jax.random.PRNGKey(0)
    k0, k1, k2, k3, k4 = jax.random.split(key, 5)

    B, D0, D1, OUT = 8, 128, 64, 128

    # Dense(Linear(D0, OUT), None, Linear(D1, OUT)) -- typical usage where one
    # slot is None and gets skipped in the sum.
    params = [
        _init_linear(k0, OUT, D0),
        None,
        _init_linear(k1, OUT, D1),
    ]

    # forward(*xs) with three inputs; xs[-len(Ws):] keeps all three, the one
    # paired with None is ignored.
    x0 = jax.random.normal(k2, (B, D0), jnp.float32)
    x1 = jax.random.normal(k3, (B, D1), jnp.float32)  # paired with None -> unused
    x2 = jax.random.normal(k4, (B, D1), jnp.float32)
    xs = [x0, x1, x2]

    out = dense_forward(xs, params)
    out = jax.block_until_ready(out)

    # Pure-JAX reference of the PyTorch semantics.
    ref = (x0 @ params[0][0].T + params[0][1]) + (x2 @ params[2][0].T + params[2][1])
    assert out.shape == (B, OUT)
    assert jnp.allclose(out, ref, atol=1e-4, rtol=1e-4)

    print("KERNEL_OK")
</pallas_src>

<mosaic_0001>
module attributes {stable_mosaic.version = 11 : i64} {
  func.func @_dense_kernel(%arg0: i32, %arg1: i32, %arg2: memref<8x128xf32, #tpu.memory_space<vmem>>, %arg3: memref<128x128xf32, #tpu.memory_space<vmem>>, %arg4: memref<8x128xf32, #tpu.memory_space<vmem>>, %arg5: memref<128x128xf32, #tpu.memory_space<vmem>>, %arg6: memref<1x128xf32, #tpu.memory_space<vmem>>, %arg7: memref<8x128xf32, #tpu.memory_space<vmem>>) attributes {dimension_semantics = [#tpu.dimension_semantics<parallel>, #tpu.dimension_semantics<parallel>], iteration_bounds = array<i64: 1, 1>, scalar_prefetch = 0 : i64, scratch_operands = 0 : i64, tpu.core_type = #tpu.core_type<tc>, window_params = [{transform_indices = @transform_0, window_bounds = array<i64: 8, 128>}, {transform_indices = @transform_1, window_bounds = array<i64: 128, 128>}, {transform_indices = @transform_2, window_bounds = array<i64: 8, 128>}, {transform_indices = @transform_3, window_bounds = array<i64: 128, 128>}, {transform_indices = @transform_4, window_bounds = array<i64: 1, 128>}, {transform_indices = @transform_5, window_bounds = array<i64: 8, 128>}]} {
    %c0 = arith.constant 0 : index
    %c0_0 = arith.constant 0 : index
    %0 = vector.load %arg6[%c0, %c0_0] : memref<1x128xf32, #tpu.memory_space<vmem>>, vector<1x128xf32>
    %c0_1 = arith.constant 0 : index
    %c0_2 = arith.constant 0 : index
    %1 = vector.load %arg2[%c0_1, %c0_2] : memref<8x128xf32, #tpu.memory_space<vmem>>, vector<8x128xf32>
    %c0_3 = arith.constant 0 : index
    %c0_4 = arith.constant 0 : index
    %2 = vector.load %arg3[%c0_3, %c0_4] : memref<128x128xf32, #tpu.memory_space<vmem>>, vector<128x128xf32>
    %cst = arith.constant dense<0.000000e+00> : vector<8x128xf32>
    %3 = tpu.matmul %1, %2, %cst {dimension_numbers = #tpu.dot_dimension_numbers<[1], [0], [0], [1], [0, 0, 1, 1], [], []>} : vector<8x128xf32>, vector<128x128xf32>, vector<8x128xf32> -> vector<8x128xf32>
    %4 = vector.broadcast %0 : vector<1x128xf32> to vector<8x128xf32>
    %5 = arith.addf %4, %3 : vector<8x128xf32>
    %c0_5 = arith.constant 0 : index
    %c0_6 = arith.constant 0 : index
    %6 = vector.load %arg4[%c0_5, %c0_6] : memref<8x128xf32, #tpu.memory_space<vmem>>, vector<8x128xf32>
    %c0_7 = arith.constant 0 : index
    %c0_8 = arith.constant 0 : index
    %7 = vector.load %arg5[%c0_7, %c0_8] : memref<128x128xf32, #tpu.memory_space<vmem>>, vector<128x128xf32>
    %cst_9 = arith.constant dense<0.000000e+00> : vector<8x128xf32>
    %8 = tpu.matmul %6, %7, %cst_9 {dimension_numbers = #tpu.dot_dimension_numbers<[1], [0], [0], [1], [0, 0, 1, 1], [], []>} : vector<8x128xf32>, vector<128x128xf32>, vector<8x128xf32> -> vector<8x128xf32>
    %9 = arith.addf %5, %8 : vector<8x128xf32>
    %c0_10 = arith.constant 0 : index
    %c0_11 = arith.constant 0 : index
    %10 = vector.load %arg7[%c0_10, %c0_11] : memref<8x128xf32, #tpu.memory_space<vmem>>, vector<8x128xf32>
    tpu.vector_store %arg7[%c0_10, %c0_11], %9 {strides = array<i32>} : memref<8x128xf32, #tpu.memory_space<vmem>>, vector<8x128xf32>,
    return
  }
  func.func @transform_0(%arg0: i32, %arg1: i32) -> (i32, i32) {
    %c0_i32 = arith.constant 0 : i32
    %c0_i32_0 = arith.constant 0 : i32
    return %arg1, %c0_i32 : i32, i32
  }
  func.func @transform_1(%arg0: i32, %arg1: i32) -> (i32, i32) {
    %c0_i32 = arith.constant 0 : i32
    %c0_i32_0 = arith.constant 0 : i32
    return %c0_i32, %arg0 : i32, i32
  }
  func.func @transform_2(%arg0: i32, %arg1: i32) -> (i32, i32) {
    %c0_i32 = arith.constant 0 : i32
    %c0_i32_0 = arith.constant 0 : i32
    return %arg1, %c0_i32 : i32, i32
  }
  func.func @transform_3(%arg0: i32, %arg1: i32) -> (i32, i32) {
    %c0_i32 = arith.constant 0 : i32
    %c0_i32_0 = arith.constant 0 : i32
    return %c0_i32, %arg0 : i32, i32
  }
  func.func @transform_4(%arg0: i32, %arg1: i32) -> (i32, i32) {
    %c0_i32 = arith.constant 0 : i32
    %c0_i32_0 = arith.constant 0 : i32
    return %c0_i32, %arg0 : i32, i32
  }
  func.func @transform_5(%arg0: i32, %arg1: i32) -> (i32, i32) {
    %c0_i32 = arith.constant 0 : i32
    return %arg1, %arg0 : i32, i32
  }
}

</mosaic_0001>

<llo_original>
// kernel: tpu_custom_call.1
$region0: #{tpu_custom_call.1}
  #allocation0 [shape = 'u32[]', space=smem, size = 0x4, offset = 0x4, fixed_abs, tag = 'smem constant byte address 0x4 - core index']
  #allocation1 [shape = 'u32[144,128]{1,0:T(1,128)}', space=vmem, size = 0x12000, scoped, tag = 'internal scratch']
  %s0 = inlined_call_operand.hbm [shape: f32[8,128], index: 0, kind: input, shape index: {}]
  %s1 = inlined_call_operand.hbm [shape: f32[128,128], index: 1, kind: input, shape index: {}]
  %s2 = inlined_call_operand.hbm [shape: f32[8,128], index: 2, kind: input, shape index: {}]
  %s3 = inlined_call_operand.hbm [shape: f32[128,128], index: 3, kind: input, shape index: {}]
  %s4 = inlined_call_operand.vmem [shape: f32[1,128], index: 4, kind: input, shape index: {}]
  %s5 = inlined_call_operand.hbm [shape: f32[8,128], index: 5, kind: output, shape index: {}]
  %s6 = sld [smem:[#allocation0]]
  $region46: #{tpu_custom_call.1} parent=0
    _
  %s8 = ssub.s32 1, %s6
  %s9 = scalar_select 0, %s8, %s6
  $region1: #{tpu_custom_call.1} parent=0
    #allocation2 [shape = 'u8[4096]{0}', space=vmem, size = 0x1000, scoped, tag = 'input window, operand 0, single buffered']
    #allocation3 [shape = 's32[1]{0}', space=sflag, size = 0x4, scoped, tag = 'scoped memory for tpu_custom_call.1']
    #allocation4 [shape = 's32[1]{0}', space=sflag, size = 0x4, scoped, tag = 'scoped memory for tpu_custom_call.1']
    #allocation5 [shape = 'u8[65536]{0}', space=vmem, size = 0x10000, scoped, tag = 'input window, operand 1, single buffered']
    #allocation6 [shape = 's32[1]{0}', space=sflag, size = 0x4, scoped, tag = 'scoped memory for tpu_custom_call.1']
    #allocation7 [shape = 'u8[4096]{0}', space=vmem, size = 0x1000, scoped, tag = 'input window, operand 2, single buffered']
    #allocation8 [shape = 'u8[65536]{0}', space=vmem, size = 0x10000, scoped, tag = 'input window, operand 3, single buffered']
    #allocation9 [shape = 's32[1]{0}', space=sflag, size = 0x4, scoped, tag = 'scoped memory for tpu_custom_call.1']
    #allocation10 [shape = 'u8[4096]{0}', space=vmem, size = 0x1000, scoped, tag = 'output window, operand 0, single buffered']
    %10 = vsyncpa [#allocation3], 0
    %11 = vsyncpa [#allocation6], 0
    %12 = vsyncpa [#allocation9], 0
    %13 = vsyncpa [#allocation4], 0
    // Predicated region
    $region2: #{tpu_custom_call.1} parent=1 // pred_check
      _
    $region3: #{tpu_custom_call.1} parent=1 // pred_check_branch
      %15 = sbr.rel (0) target = $region5
    $region4: #{tpu_custom_call.1} parent=1 // pred_region
      %s17 = ssub.s32 128, 128
      %18 = vsyncadd [#allocation3], %s17
      %s20 = sshll.u32 [#allocation2], 4
      %s21 = int_to_ptr.vmem [resolvable:$true] %s20
      %23 = dma.hbm_to_vmem [thread:$0]  %s0, 128, %s21, [#allocation3]
    $region5: #{tpu_custom_call.1} parent=1 // pred_fallthru
      _
    // Predicated region
    $region6: #{tpu_custom_call.1} parent=1 // pred_check
      _
    $region7: #{tpu_custom_call.1} parent=1 // pred_check_branch
      %25 = sbr.rel (0) target = $region9
    $region8: #{tpu_custom_call.1} parent=1 // pred_region
      %s27 = ssub.s32 2048, 2048
      %28 = vsyncadd [#allocation6], %s27
      %s29 = sshll.u32 [#allocation5], 4
      %s30 = int_to_ptr.vmem [resolvable:$true] %s29
      %35 = dma.hbm_to_vmem [thread:$0]  %s1, 2048, %s30, [#allocation6], 128, 128, 8
    $region9: #{tpu_custom_call.1} parent=1 // pred_fallthru
      _
    // Predicated region
    $region10: #{tpu_custom_call.1} parent=1 // pred_check
      _
    $region11: #{tpu_custom_call.1} parent=1 // pred_check_branch
      %37 = sbr.rel (0) target = $region13
    $region12: #{tpu_custom_call.1} parent=1 // pred_region
      %s39 = ssub.s32 128, 128
      %40 = vsyncadd [#allocation6], %s39
      %s42 = sshll.u32 [#allocation7], 4
      %s43 = int_to_ptr.vmem [resolvable:$true] %s42
      %45 = dma.hbm_to_vmem [thread:$0]  %s2, 128, %s43, [#allocation6]
    $region13: #{tpu_custom_call.1} parent=1 // pred_fallthru
      _
    // Predicated region
    $region14: #{tpu_custom_call.1} parent=1 // pred_check
      _
    $region15: #{tpu_custom_call.1} parent=1 // pred_check_branch
      %47 = sbr.rel (0) target = $region17
    $region16: #{tpu_custom_call.1} parent=1 // pred_region
      %s49 = ssub.s32 2048, 2048
      %50 = vsyncadd [#allocation9], %s49
      %s51 = sshll.u32 [#allocation8], 4
      %s52 = int_to_ptr.vmem [resolvable:$true] %s51
      %57 = dma.hbm_to_vmem [thread:$0]  %s3, 2048, %s52, [#allocation9], 128, 128, 8
    $region17: #{tpu_custom_call.1} parent=1 // pred_fallthru
      _
    // Predicated region
    $region18: #{tpu_custom_call.1} parent=1 // pred_check
      _
    $region19: #{tpu_custom_call.1} parent=1 // pred_check_branch
      %59 = sbr.rel (0) target = $region21
    $region20: #{tpu_custom_call.1} parent=1 // pred_region
      _
    $region21: #{tpu_custom_call.1} parent=1 // pred_fallthru
      _
    // Predicated region
    $region22: #{tpu_custom_call.1} parent=1 // pred_check
      _
    $region23: #{tpu_custom_call.1} parent=1 // pred_check_branch
      %61 = sbr.rel (0) target = $region25
    $region24: #{tpu_custom_call.1} parent=1 // pred_region
      %62 = dma.done [#allocation3], 128
    $region25: #{tpu_custom_call.1} parent=1 // pred_fallthru
      _
    // Predicated region
    $region26: #{tpu_custom_call.1} parent=1 // pred_check
      _
    $region27: #{tpu_custom_call.1} parent=1 // pred_check_branch
      %64 = sbr.rel (0) target = $region29
    $region28: #{tpu_custom_call.1} parent=1 // pred_region
      %65 = dma.done [#allocation6], 2048
    $region29: #{tpu_custom_call.1} parent=1 // pred_fallthru
      _
    // Predicated region
    $region30: #{tpu_custom_call.1} parent=1 // pred_check
      _
    $region31: #{tpu_custom_call.1} parent=1 // pred_check_branch
      %67 = sbr.rel (0) target = $region33
    $region32: #{tpu_custom_call.1} parent=1 // pred_region
      %68 = dma.done [#allocation6], 128
    $region33: #{tpu_custom_call.1} parent=1 // pred_fallthru
      _
    // Predicated region
    $region34: #{tpu_custom_call.1} parent=1 // pred_check
      _
    $region35: #{tpu_custom_call.1} parent=1 // pred_check_branch
      %70 = sbr.rel (0) target = $region37
    $region36: #{tpu_custom_call.1} parent=1 // pred_region
      %71 = dma.done [#allocation9], 2048
    $region37: #{tpu_custom_call.1} parent=1 // pred_fallthru
      _
    %v72 = vld [vmem:[%s4] sm:$0x1]
    %v73 = vld [vmem:[#allocation2] sm:$0xff]
    %v74 = vld [vmem:[#allocation5] sm:$0xff]
    %v75 = vld [vmem:[#allocation5 + $0x8] sm:$0xff]
    %v76 = vld [vmem:[#allocation5 + $0x10] sm:$0xff]
    %v77 = vld [vmem:[#allocation5 + $0x18] sm:$0xff]
    %v78 = vld [vmem:[#allocation5 + $0x20] sm:$0xff]
    %v79 = vld [vmem:[#allocation5 + $0x28] sm:$0xff]
    %v80 = vld [vmem:[#allocation5 + $0x30] sm:$0xff]
    %v81 = vld [vmem:[#allocation5 + $0x38] sm:$0xff]
    %v82 = vld [vmem:[#allocation5 + $0x40] sm:$0xff]
    %v83 = vld [vmem:[#allocation5 + $0x48] sm:$0xff]
    %v84 = vld [vmem:[#allocation5 + $0x50] sm:$0xff]
    %v85 = vld [vmem:[#allocation5 + $0x58] sm:$0xff]
    %v86 = vld [vmem:[#allocation5 + $0x60] sm:$0xff]
    %v87 = vld [vmem:[#allocation5 + $0x68] sm:$0xff]
    %v88 = vld [vmem:[#allocation5 + $0x70] sm:$0xff]
    %v89 = vld [vmem:[#allocation5 + $0x78] sm:$0xff]
    %90 = vmatprep.subr.mxu0 0.0
    %91 = vmatpush1.msra.mxu0 %v89
    %92 = vmatprep.subr.mxu0 0.0
    %93 = vmatpush1.msra.mxu0 %v88
    %94 = vmatprep.subr.mxu0 0.0
    %95 = vmatpush1.msra.mxu0 %v87
    %96 = vmatprep.subr.mxu0 0.0
    %97 = vmatpush1.msra.mxu0 %v86
    %98 = vmatprep.subr.mxu0 0.0
    %99 = vmatpush1.msra.mxu0 %v85
    %100 = vmatprep.subr.mxu0 0.0
    %101 = vmatpush1.msra.mxu0 %v84
    %102 = vmatprep.subr.mxu0 0.0
    %103 = vmatpush1.msra.mxu0 %v83
    %104 = vmatprep.subr.mxu0 0.0
    %105 = vmatpush1.msra.mxu0 %v82
    %106 = vmatprep.subr.mxu0 0.0
    %107 = vmatpush1.msra.mxu0 %v81
    %108 = vmatprep.subr.mxu0 0.0
    %109 = vmatpush1.msra.mxu0 %v80
    %110 = vmatprep.subr.mxu0 0.0
    %111 = vmatpush1.msra.mxu0 %v79
    %112 = vmatprep.subr.mxu0 0.0
    %113 = vmatpush1.msra.mxu0 %v78
    %114 = vmatprep.subr.mxu0 0.0
    %115 = vmatpush1.msra.mxu0 %v77
    %116 = vmatprep.subr.mxu0 0.0
    %117 = vmatpush1.msra.mxu0 %v76
    %118 = vmatprep.subr.mxu0 0.0
    %119 = vmatpush1.msra.mxu0 %v75
    %120 = vmatprep.subr.mxu0 0.0
    %121 = vmatpush1.msra.mxu0 %v74
    %122 = vmatprep.subr.mxu0 0.0
    %123 = vmatpush2.msra.mxu0 0.0
    %124 = vmatprep.subr.mxu0 0.0
    %125 = vmatpush2.msra.mxu0 0.0
    %126 = vmatprep.subr.mxu0 0.0
    %127 = vmatpush2.msra.mxu0 0.0
    %128 = vmatprep.subr.mxu0 0.0
    %129 = vmatpush2.msra.mxu0 0.0
    %130 = vmatprep.subr.mxu0 0.0
    %131 = vmatpush2.msra.mxu0 0.0
    %132 = vmatprep.subr.mxu0 0.0
    %133 = vmatpush2.msra.mxu0 0.0
    %134 = vmatprep.subr.mxu0 0.0
    %135 = vmatpush2.msra.mxu0 0.0
    %136 = vmatprep.subr.mxu0 0.0
    %137 = vmatpush2.msra.mxu0 0.0
    %138 = vmatprep.subr.mxu0 0.0
    %139 = vmatpush2.msra.mxu0 0.0
    %140 = vmatprep.subr.mxu0 0.0
    %141 = vmatpush2.msra.mxu0 0.0
    %142 = vmatprep.subr.mxu0 0.0
    %143 = vmatpush2.msra.mxu0 0.0
    %144 = vmatprep.subr.mxu0 0.0
    %145 = vmatpush2.msra.mxu0 0.0
    %146 = vmatprep.subr.mxu0 0.0
    %147 = vmatpush2.msra.mxu0 0.0
    %148 = vmatprep.subr.mxu0 0.0
    %149 = vmatpush2.msra.mxu0 0.0
    %150 = vmatprep.subr.mxu0 0.0
    %151 = vmatpush2.msra.mxu0 0.0
    %152 = vmatprep.subr.mxu0 0.0
    %153 = vmatpush2.msra.mxu0 0.0
    %154 = vmatprep.mubr.f32.mxu0 0.0
    %155 = vmatmul.mubr.f32.gmra.mxu0 %v73
    %v156 = vpop.f32.mrf.mxu0
    %v157 = vadd.f32 0.0, %v156
    %v158 = vpop.f32.mrf.mxu0
    %159 = vdwg.mxu0
    %v161 = vlaneseq
    %v162 = vshrl.u32 %v161, 7
    %v163 = vsub.s32 0, %v162
    %v164 = vrot.slane %v72, %v163
    %v166 = vadd.f32 %v164, %v157
    %v167 = vld [vmem:[#allocation7] sm:$0xff]
    %v168 = vld [vmem:[#allocation8] sm:$0xff]
    %v169 = vld [vmem:[#allocation8 + $0x8] sm:$0xff]
    %v170 = vld [vmem:[#allocation8 + $0x10] sm:$0xff]
    %v171 = vld [vmem:[#allocation8 + $0x18] sm:$0xff]
    %v172 = vld [vmem:[#allocation8 + $0x20] sm:$0xff]
    %v173 = vld [vmem:[#allocation8 + $0x28] sm:$0xff]
    %v174 = vld [vmem:[#allocation8 + $0x30] sm:$0xff]
    %v175 = vld [vmem:[#allocation8 + $0x38] sm:$0xff]
    %v176 = vld [vmem:[#allocation8 + $0x40] sm:$0xff]
    %v177 = vld [vmem:[#allocation8 + $0x48] sm:$0xff]
    %v178 = vld [vmem:[#allocation8 + $0x50] sm:$0xff]
    %v179 = vld [vmem:[#allocation8 + $0x58] sm:$0xff]
    %v180 = vld [vmem:[#allocation8 + $0x60] sm:$0xff]
    %v181 = vld [vmem:[#allocation8 + $0x68] sm:$0xff]
    %v182 = vld [vmem:[#allocation8 + $0x70] sm:$0xff]
    %v183 = vld [vmem:[#allocation8 + $0x78] sm:$0xff]
    %184 = vmatprep.subr.mxu0 0.0
    %185 = vmatpush1.msra.mxu0 %v183
    %186 = vmatprep.subr.mxu0 0.0
    %187 = vmatpush1.msra.mxu0 %v182
    %188 = vmatprep.subr.mxu0 0.0
    %189 = vmatpush1.msra.mxu0 %v181
    %190 = vmatprep.subr.mxu0 0.0
    %191 = vmatpush1.msra.mxu0 %v180
    %192 = vmatprep.subr.mxu0 0.0
    %193 = vmatpush1.msra.mxu0 %v179
    %194 = vmatprep.subr.mxu0 0.0
    %195 = vmatpush1.msra.mxu0 %v178
    %196 = vmatprep.subr.mxu0 0.0
    %197 = vmatpush1.msra.mxu0 %v177
    %198 = vmatprep.subr.mxu0 0.0
    %199 = vmatpush1.msra.mxu0 %v176
    %200 = vmatprep.subr.mxu0 0.0
    %201 = vmatpush1.msra.mxu0 %v175
    %202 = vmatprep.subr.mxu0 0.0
    %203 = vmatpush1.msra.mxu0 %v174
    %204 = vmatprep.subr.mxu0 0.0
    %205 = vmatpush1.msra.mxu0 %v173
    %206 = vmatprep.subr.mxu0 0.0
    %207 = vmatpush1.msra.mxu0 %v172
    %208 = vmatprep.subr.mxu0 0.0
    %209 = vmatpush1.msra.mxu0 %v171
    %210 = vmatprep.subr.mxu0 0.0
    %211 = vmatpush1.msra.mxu0 %v170
    %212 = vmatprep.subr.mxu0 0.0
    %213 = vmatpush1.msra.mxu0 %v169
    %214 = vmatprep.subr.mxu0 0.0
    %215 = vmatpush1.msra.mxu0 %v168
    %216 = vmatprep.subr.mxu0 0.0
    %217 = vmatpush2.msra.mxu0 0.0
    %218 = vmatprep.subr.mxu0 0.0
    %219 = vmatpush2.msra.mxu0 0.0
    %220 = vmatprep.subr.mxu0 0.0
    %221 = vmatpush2.msra.mxu0 0.0
    %222 = vmatprep.subr.mxu0 0.0
    %223 = vmatpush2.msra.mxu0 0.0
    %224 = vmatprep.subr.mxu0 0.0
    %225 = vmatpush2.msra.mxu0 0.0
    %226 = vmatprep.subr.mxu0 0.0
    %227 = vmatpush2.msra.mxu0 0.0
    %228 = vmatprep.subr.mxu0 0.0
    %229 = vmatpush2.msra.mxu0 0.0
    %230 = vmatprep.subr.mxu0 0.0
    %231 = vmatpush2.msra.mxu0 0.0
    %232 = vmatprep.subr.mxu0 0.0
    %233 = vmatpush2.msra.mxu0 0.0
    %234 = vmatprep.subr.mxu0 0.0
    %235 = vmatpush2.msra.mxu0 0.0
    %236 = vmatprep.subr.mxu0 0.0
    %237 = vmatpush2.msra.mxu0 0.0
    %238 = vmatprep.subr.mxu0 0.0
    %239 = vmatpush2.msra.mxu0 0.0
    %240 = vmatprep.subr.mxu0 0.0
    %241 = vmatpush2.msra.mxu0 0.0
    %242 = vmatprep.subr.mxu0 0.0
    %243 = vmatpush2.msra.mxu0 0.0
    %244 = vmatprep.subr.mxu0 0.0
    %245 = vmatpush2.msra.mxu0 0.0
    %246 = vmatprep.subr.mxu0 0.0
    %247 = vmatpush2.msra.mxu0 0.0
    %248 = vmatprep.mubr.f32.mxu0 0.0
    %249 = vmatmul.mubr.f32.gmra.mxu0 %v167
    %v250 = vpop.f32.mrf.mxu0
    %v251 = vadd.f32 0.0, %v250
    %v252 = vpop.f32.mrf.mxu0
    %253 = vdwg.mxu0
    %v254 = vadd.f32 %v166, %v251
    %255 = vst [vmem:[#allocation10] sm:$0xff] %v254
    // Predicated region
    $region38: #{tpu_custom_call.1} parent=1 // pred_check
      _
    $region39: #{tpu_custom_call.1} parent=1 // pred_check_branch
      %257 = sbr.rel (0) target = $region41
    $region40: #{tpu_custom_call.1} parent=1 // pred_region
      %s259 = ssub.s32 128, 128
      %260 = vsyncadd [#allocation4], %s259
      %s262 = sshll.u32 [#allocation10], 4
      %s263 = int_to_ptr.vmem [resolvable:$true] %s262
      %265 = dma.vmem_to_hbm [thread:$0]  %s263, 128, %s5, [#allocation4]
    $region41: #{tpu_custom_call.1} parent=1 // pred_fallthru
      _
    // Predicated region
    $region42: #{tpu_custom_call.1} parent=1 // pred_check
      _
    $region43: #{tpu_custom_call.1} parent=1 // pred_check_branch
      %267 = sbr.rel (0) target = $region45
    $region44: #{tpu_custom_call.1} parent=1 // pred_region
      %268 = dma.done [#allocation4], 128
    $region45: #{tpu_custom_call.1} parent=1 // pred_fallthru
      _
    %269 = vsyncpa [#allocation3], 1
    %270 = vsyncpa [#allocation6], 1
    %271 = vsyncpa [#allocation9], 1
    %272 = vsyncpa [#allocation4], 1

</llo_original>
